<compile_context>
chip_gen: v5e
topology: v5e:2x2
jax: 0.10.0
libtpu: 0.0.40
codegen_flags: <defaults>
</compile_context>

<pallas_src>
import functools
import numpy as np
import jax
import jax.numpy as jnp
from jax.experimental import pallas as pl
from jax.experimental.pallas import tpu as pltpu

_MM_DTYPE = jnp.bfloat16      # matmul-input dtype at the kernel boundary (f32 accum)
K_NEIGS = 1                   # K_neigs=[1] in the reference HyperEncoder
_TM_CAP = 4608                # max lanes per output tile
_PALLAS_MIN_M = 1024          # per-image Ho*Wo below which we use plain XLA


def _round_up(x, m):
    return (x + m - 1) // m * m


# -----------------------------------------------------------------------------
# Pallas kernel — transposed conv matmul:  out^T = W(coutp,Kp) @ A(Kp,tm) + bias
# M (spatial) sits on the lane axis of both the patch tile and the output tile.
# -----------------------------------------------------------------------------
def _convT_kernel(w_ref, a_ref, b_ref, o_ref):
    o_ref[...] = (jnp.dot(w_ref[...], a_ref[...],
                          preferred_element_type=jnp.float32) + b_ref[...])


def _pick_tm(M):
    """Largest multiple-of-128 divisor of M that is <= _TM_CAP (M % 128 == 0)."""
    if M <= _TM_CAP:
        return M
    best, d = 128, 128
    while d <= _TM_CAP:
        if M % d == 0:
            best = d
        d += 128
    return best


def pallas_convT(patches, w_t, b_col):
    """patches (B,Kp,M) bf16, w_t (coutp,Kp) bf16, b_col (coutp,1) f32
       -> (B, coutp, M) f32."""
    B, Kp, M = patches.shape
    coutp = w_t.shape[0]
    tm = _pick_tm(M)
    return pl.pallas_call(
        _convT_kernel,
        out_shape=jax.ShapeDtypeStruct((B, coutp, M), jnp.float32),
        grid_spec=pltpu.PrefetchScalarGridSpec(
            num_scalar_prefetch=0,
            grid=(B, M // tm),
            in_specs=[
                # weight slab + bias column: constant block index -> DMA'd once
                pl.BlockSpec((coutp, Kp), lambda b, i: (0, 0)),
                # patch tile: batch dim squeezed, M tiled on the lane axis
                pl.BlockSpec((None, Kp, tm), lambda b, i: (b, 0, i)),
                pl.BlockSpec((coutp, 1), lambda b, i: (0, 0)),
            ],
            out_specs=pl.BlockSpec((None, coutp, tm), lambda b, i: (b, 0, i))),
        compiler_params=pltpu.CompilerParams(
            dimension_semantics=("parallel", "parallel"),
            vmem_limit_bytes=48 * 1024 * 1024),
    )(w_t, patches, b_col)


# -----------------------------------------------------------------------------
# NCHW glue ops (plain JAX, fused by the surrounding jit)
# -----------------------------------------------------------------------------
def conv2d(x, cp, padding=0):
    """NCHW conv via im2col.  Large-spatial layers -> Pallas transposed matmul
    (M on lanes); small layers -> plain f32 XLA einsum."""
    B, C, H, W = x.shape
    k, cout = cp["ksize"], cp["cout"]
    Ho = H + 2 * padding - k + 1
    Wo = W + 2 * padding - k + 1
    M = Ho * Wo
    use_pallas = (M % 128 == 0) and (M >= _PALLAS_MIN_M)

    if use_pallas:
        Kp = cp["w_t"].shape[1]
        xb = x.astype(_MM_DTYPE)
        if padding:
            xb = jnp.pad(xb, ((0, 0), (0, 0), (padding, padding), (padding, padding)))
        if k == 1:
            parts = [xb.reshape(B, C, M)]
        else:
            parts = [xb[:, :, dh:dh + Ho, dw:dw + Wo].reshape(B, C, M)
                     for dh in range(k) for dw in range(k)]
        k_real = k * k * C
        if Kp > k_real:   # K padding written as part of the same concat pass
            parts.append(jnp.zeros((B, Kp - k_real, M), _MM_DTYPE))
        patches = parts[0] if len(parts) == 1 else jnp.concatenate(parts, axis=1)
        out = pallas_convT(patches, cp["w_t"], cp["b_col"])       # (B, coutp, M) f32
        return out[:, :cout, :].reshape(B, cout, Ho, Wo)

    # tiny layers: padded Pallas tiles would be >90% waste -> plain XLA (f32)
    xp = x
    if padding:
        xp = jnp.pad(xp, ((0, 0), (0, 0), (padding, padding), (padding, padding)))
    if k == 1:
        patches = xp.reshape(B, C, M)
    else:
        parts = [xp[:, :, dh:dh + Ho, dw:dw + Wo].reshape(B, C, M)
                 for dh in range(k) for dw in range(k)]
        patches = jnp.concatenate(parts, axis=1)
    out = jnp.einsum('ok,bkm->bom', cp["w_full"], patches) + cp["b_full"][None, :, None]
    return out.reshape(B, cout, Ho, Wo)


def batchnorm(x, g, b, eps=1e-5):
    # training-mode batch stats (biased var), NCHW
    mean = x.mean(axis=(0, 2, 3), keepdims=True)
    var = x.var(axis=(0, 2, 3), keepdims=True)
    return ((x - mean) * jax.lax.rsqrt(var + eps) * g[None, :, None, None]
            + b[None, :, None, None])


def maxpool2(x):
    B, C, H, W = x.shape
    return x.reshape(B, C, H // 2, 2, W // 2, 2).max(axis=(3, 5))


def _interp_matrix(n_in, n_out):
    # align_corners=True bilinear (torch nn.UpsamplingBilinear2d)
    src = jnp.arange(n_out, dtype=jnp.float32) * ((n_in - 1) / (n_out - 1))
    i0 = jnp.floor(src).astype(jnp.int32)
    i1 = jnp.minimum(i0 + 1, n_in - 1)
    w1 = src - i0.astype(jnp.float32)
    w0 = 1.0 - w1
    M = jnp.zeros((n_out, n_in), jnp.float32)
    M = M.at[jnp.arange(n_out), i0].add(w0)
    M = M.at[jnp.arange(n_out), i1].add(w1)
    return M


def upsample_bilinear_2x(x):
    B, C, H, W = x.shape
    Mh = _interp_matrix(H, 2 * H)
    Mw = _interp_matrix(W, 2 * W)
    x = jnp.einsum('oh,bchw->bcow', Mh, x)
    x = jnp.einsum('pw,bcow->bcop', Mw, x)
    return x


# -----------------------------------------------------------------------------
# Parameter init.  Conv weights stored as (coutp, Kp) bf16 slabs (transposed,
# padded) for the Pallas path plus unpadded f32 copies for the XLA fallback;
# bias as a padded (coutp, 1) f32 column.
# -----------------------------------------------------------------------------
def _keygen(seed=0):
    key = jax.random.PRNGKey(seed)
    while True:
        key, sub = jax.random.split(key)
        yield sub


def init_conv(kg, cout, cin, k, bias=False):
    fan_in = cin * k * k
    w = jax.random.normal(next(kg), (cout, cin, k, k), jnp.float32) / np.sqrt(fan_in)
    K = cin * k * k
    Kp = _round_up(K, 16)          # bf16 sublane tile — matches physical layout
    coutp = _round_up(cout, 16)
    w_full = jnp.transpose(w, (0, 2, 3, 1)).reshape(cout, K)   # (cout, kh*kw*cin)
    w_t = jnp.pad(w_full, ((0, coutp - cout), (0, Kp - K))).astype(_MM_DTYPE)
    if bias:
        b = 0.01 * jax.random.normal(next(kg), (cout,), jnp.float32)
    else:
        b = jnp.zeros((cout,), jnp.float32)
    b_col = jnp.pad(b, (0, coutp - cout))[:, None]
    return {"w_t": w_t, "w_full": w_full, "b_full": b, "b_col": b_col,
            "cout": cout, "ksize": k}


def init_bn(c):
    return {"g": jnp.ones((c,), jnp.float32), "b": jnp.zeros((c,), jnp.float32)}


def init_conv_bn(kg, cin, cout, k):
    return {"conv": init_conv(kg, cout, cin, k, bias=False), "bn": init_bn(cout)}


def conv_bn_act(p, x, padding, act=True):
    x = conv2d(x, p["conv"], padding=padding)
    x = batchnorm(x, p["bn"]["g"], p["bn"]["b"])
    return jnp.maximum(x, 0.0) if act else x


# --- DoubleConv -------------------------------------------------------------
def init_doubleconv(kg, cin, cout):
    return {"c1": init_conv_bn(kg, cin, cout, 3),
            "c2": init_conv_bn(kg, cout, cout, 3),
            "conv1": init_conv(kg, cout, cout, 1, bias=True),
            "bn": init_bn(cout)}


def doubleconv_fwd(p, x):
    x = conv_bn_act(p["c1"], x, padding=1, act=True)
    x = conv_bn_act(p["c2"], x, padding=1, act=False)
    h = x
    x = conv2d(x, p["conv1"], padding=0)          # bias fused in kernel
    x = batchnorm(x, p["bn"]["g"], p["bn"]["b"])
    return jnp.maximum(h + x, 0.0)


# --- UEncoder ---------------------------------------------------------------
def init_uencoder(kg, enc_ch):
    cins = [3] + list(enc_ch[:-1])
    return {f"res{i+1}": init_doubleconv(kg, cins[i], enc_ch[i]) for i in range(5)}


def uencoder_fwd(p, x):
    feats = []
    for i in range(5):
        x = doubleconv_fwd(p[f"res{i+1}"], x)
        feats.append(x)
        x = maxpool2(x)
    feats.append(x)
    return feats


# --- Hypergraph layer (tiny: plain XLA dots) ---------------------------------
def local_kernel(size, kernel_size=3, stride=1):
    inp = np.arange(size * size).reshape(size, size)
    patches = []
    for i in range(0, size - kernel_size + 1, stride):
        for j in range(0, size - kernel_size + 1, stride):
            patches.append(inp[i:i + kernel_size, j:j + kernel_size].reshape(-1))
    if patches:
        inp_unf = np.stack(patches, axis=0)
        edge = inp_unf.shape[0]
        H_local = np.zeros((size * size, edge), np.float32)
        for e in range(edge):
            H_local[inp_unf[e], e] = 1.0
    else:
        H_local = np.zeros((size * size, 0), np.float32)
    return jnp.asarray(H_local)


def init_hyper_layer(kg, channel, node, kernel_size=3, stride=1):
    return {"lin_w": jax.random.normal(next(kg), (channel, channel), jnp.float32) / np.sqrt(channel),
            "lin_b": 0.01 * jax.random.normal(next(kg), (channel,), jnp.float32),
            "bn": init_bn(channel),
            "local_H": local_kernel(node, kernel_size, stride)}


def _incidence_from_inds(inds, total):
    rows = jnp.arange(total)[:, None]
    H = jnp.zeros((total, total), jnp.float32)
    return H.at[rows, inds].set(1.0)


def g_hgnn_layer_fwd(p, x):
    B, N, C = x.shape
    xm = x.reshape(B * N, C)
    total = B * N

    # pairwise squared distances (tiny, total <= 72: plain XLA dots)
    inner = -2.0 * (xm @ xm.T)
    sq = jnp.sum(xm * xm, axis=-1, keepdims=True)
    dists = sq + inner + sq.T

    k = K_NEIGS
    _, inds = jax.lax.top_k(-dists, k + 1)            # k+1 smallest distances
    H = _incidence_from_inds(inds, total)
    # With unit weights every row of H has exactly k+1 ones, so
    # max_k = int(Dv.max()) == k+1 is a static constant and new_H == H
    # (no host sync needed; whole forward stays inside one jit).
    new_H = H

    # block-diagonal local incidence
    E = p["local_H"].shape[1]
    localH = jnp.zeros((total, B * E), jnp.float32)
    for i in range(B):
        localH = localH.at[i * N:(i + 1) * N, i * E:(i + 1) * E].set(p["local_H"])
    H_all = jnp.concatenate([new_H, localH], axis=1)  # (BN, BN + B*E)

    # G = Dv^-1/2 H W De^-1 H^T Dv^-1/2  (W = I)
    DV = H_all.sum(axis=1)
    DE = jnp.maximum(H_all.sum(axis=0), 1e-8)
    invDE = 1.0 / DE
    dv2 = jnp.power(DV, -0.5)
    G = dv2[:, None] * ((H_all * invDE[None, :]) @ H_all.T) * dv2[None, :]

    # HGNN: linear -> G matmul -> BN1d (batch stats) -> relu -> + residual
    residual = xm
    h = xm @ p["lin_w"].T + p["lin_b"][None, :]
    h = G @ h
    mean = h.mean(axis=0)
    var = h.var(axis=0)
    h = (h - mean) / jnp.sqrt(var + 1e-5) * p["bn"]["g"] + p["bn"]["b"]
    h = jnp.maximum(h, 0.0) + residual
    return h.reshape(B, N, C)


def g_hypernet_fwd(p, x):
    B, C, H, W = x.shape
    out = g_hgnn_layer_fwd(p, x.reshape(B, C, H * W).transpose(0, 2, 1))
    return out.transpose(0, 2, 1).reshape(B, C, H, W)


# --- DecoderBlock -----------------------------------------------------------
def init_decoder(kg, cin, cout):
    return {"c1": init_conv_bn(kg, cin, cout, 3), "c2": init_conv_bn(kg, cout, cout, 3)}


def decoder_fwd(p, x, skip=None):
    x = upsample_bilinear_2x(x)
    if skip is not None:
        x = jnp.concatenate([x, skip], axis=1)
    x = conv_bn_act(p["c1"], x, padding=1, act=True)
    x = conv_bn_act(p["c2"], x, padding=1, act=True)
    return x


# -----------------------------------------------------------------------------
# Full CPH model
# -----------------------------------------------------------------------------
def init_cph(seed, enc_ch, n_classes, spatial):
    kg = _keygen(seed)
    dec_ch = list(enc_ch[::-1])                       # [c5, c4, c3, c2, c1]
    node2, node3 = spatial // 16, spatial // 32
    p = {}
    p["uenc"] = init_uencoder(kg, enc_ch)
    p["hyper2"] = init_hyper_layer(kg, enc_ch[4], node2, 3, 1)
    p["hyper3"] = init_hyper_layer(kg, enc_ch[4], node3, 3, 1)
    p["squeeze"] = [init_conv(kg, enc_ch[4], 2 * enc_ch[4], 1, bias=True) for _ in range(2)]
    p["dec1"] = init_decoder(kg, dec_ch[0] * 2, dec_ch[1])
    p["dec2"] = init_decoder(kg, dec_ch[1] * 2, dec_ch[2])
    p["dec3"] = init_decoder(kg, dec_ch[2] * 2, dec_ch[3])
    p["dec4"] = init_decoder(kg, dec_ch[3] * 2, dec_ch[4])
    p["dec_final"] = init_decoder(kg, dec_ch[4], dec_ch[4])
    p["seg5"] = init_conv(kg, n_classes, dec_ch[4], 1, bias=True)
    return p


def parall_encoder_fwd(p, x):
    feats = uencoder_fwd(p["uenc"], x)
    hyp = [g_hypernet_fwd(p["hyper2"], feats[4]),
           g_hypernet_fwd(p["hyper3"], feats[5])]
    skips = list(feats[:4])
    for i in range(2):
        cat = jnp.concatenate([hyp[i], feats[i + 4]], axis=1)
        skips.append(conv2d(cat, p["squeeze"][i], padding=0))
    return skips


def cph_forward(p, x):
    # NCHW end-to-end (PyTorch convention)
    if x.shape[1] == 1:
        x = jnp.tile(x, (1, 3, 1, 1))
    skips = parall_encoder_fwd(p, x)
    x1 = decoder_fwd(p["dec1"], skips[-1], skips[-2])
    x2 = decoder_fwd(p["dec2"], x1, skips[-3])
    x3 = decoder_fwd(p["dec3"], x2, skips[-4])
    x4 = decoder_fwd(p["dec4"], x3, skips[-5])
    xf = decoder_fwd(p["dec_final"], x4, None)
    return conv2d(xf, p["seg5"], padding=0)


# -----------------------------------------------------------------------------
if __name__ == "__main__":
    SPATIAL = 96                     # multiple of 32; hypergraph nodes 6 and 3
    ENC_CH = [4, 8, 16, 32, 64]      # scaled-down UEncoder channels
    N_CLASSES = 9

    # --- tolerance self-check of the Pallas transposed conv matmul ----------
    k1, k2, k3 = jax.random.split(jax.random.PRNGKey(0), 3)
    p_t = jax.random.normal(k1, (2, 48, 2304), jnp.float32).astype(_MM_DTYPE)
    w_t = jax.random.normal(k2, (16, 48), jnp.float32).astype(_MM_DTYPE)
    b_t = jax.random.normal(k3, (16, 1), jnp.float32)
    got = jax.block_until_ready(jax.jit(pallas_convT)(p_t, w_t, b_t))
    want = jnp.einsum('ok,bkm->bom', w_t.astype(jnp.float32),
                      p_t.astype(jnp.float32)) + b_t[None]
    assert bool(jnp.allclose(got, want, rtol=1e-2, atol=1e-2)), \
        float(jnp.max(jnp.abs(got - want)))

    # --- full CPH forward -----------------------------------------------------
    key = jax.random.PRNGKey(0)
    x = jax.random.normal(key, (2, 3, SPATIAL, SPATIAL), jnp.float32)

    params = init_cph(0, ENC_CH, N_CLASSES, SPATIAL)
    # params closed over (static structure stays static); whole forward is one
    # jit so XLA fuses im2col, BN normalize, ReLU, residuals around the kernels.
    fwd = jax.jit(functools.partial(cph_forward, params))

    logits = jax.block_until_ready(fwd(x))

    assert logits.shape == (2, N_CLASSES, SPATIAL, SPATIAL), logits.shape
    assert bool(jnp.all(jnp.isfinite(logits)))
    print("KERNEL_OK")
</pallas_src>

<mosaic_0001>
module attributes {stable_mosaic.version = 11 : i64} {
  func.func @_convT_kernel(%arg0: i32, %arg1: i32, %arg2: memref<16x48xbf16, #tpu.memory_space<vmem>>, %arg3: memref<1x48x2304xbf16, #tpu.memory_space<vmem>>, %arg4: memref<16x1xf32, #tpu.memory_space<vmem>>, %arg5: memref<1x16x2304xf32, #tpu.memory_space<vmem>>) attributes {dimension_semantics = [#tpu.dimension_semantics<parallel>, #tpu.dimension_semantics<parallel>], iteration_bounds = array<i64: 2, 1>, scalar_prefetch = 0 : i64, scratch_operands = 0 : i64, tpu.core_type = #tpu.core_type<tc>, window_params = [{pipeline_mode = #tpu.pipeline_mode<synchronous>, transform_indices = @transform_0, window_bounds = array<i64: 16, 48>}, {transform_indices = @transform_1, window_bounds = array<i64: 1, 48, 2304>}, {pipeline_mode = #tpu.pipeline_mode<synchronous>, transform_indices = @transform_2, window_bounds = array<i64: 16, 1>}, {transform_indices = @transform_3, window_bounds = array<i64: 1, 16, 2304>}]} {
    %c0 = arith.constant 0 : index
    %c0_0 = arith.constant 0 : index
    %0 = vector.load %arg2[%c0, %c0_0] : memref<16x48xbf16, #tpu.memory_space<vmem>>, vector<16x48xbf16>
    %c0_1 = arith.constant 0 : index
    %c0_2 = arith.constant 0 : index
    %c0_3 = arith.constant 0 : index
    %1 = vector.load %arg3[%c0_1, %c0_2, %c0_3] : memref<1x48x2304xbf16, #tpu.memory_space<vmem>>, vector<1x48x2304xbf16>
    %2 = vector.shape_cast %1 : vector<1x48x2304xbf16> to vector<48x2304xbf16>
    %cst = arith.constant dense<0.000000e+00> : vector<16x2304xf32>
    %3 = tpu.matmul %0, %2, %cst {dimension_numbers = #tpu.dot_dimension_numbers<[1], [0], [0], [1], [0, 0, 1, 1], [], []>} : vector<16x48xbf16>, vector<48x2304xbf16>, vector<16x2304xf32> -> vector<16x2304xf32>
    %c0_4 = arith.constant 0 : index
    %c0_5 = arith.constant 0 : index
    %4 = vector.load %arg4[%c0_4, %c0_5] : memref<16x1xf32, #tpu.memory_space<vmem>>, vector<16x1xf32>
    %5 = vector.broadcast %4 : vector<16x1xf32> to vector<16x2304xf32>
    %6 = arith.addf %3, %5 : vector<16x2304xf32>
    %c0_6 = arith.constant 0 : index
    %c0_7 = arith.constant 0 : index
    %c0_8 = arith.constant 0 : index
    %7 = vector.load %arg5[%c0_6, %c0_7, %c0_8] : memref<1x16x2304xf32, #tpu.memory_space<vmem>>, vector<1x16x2304xf32>
    %8 = vector.shape_cast %7 : vector<1x16x2304xf32> to vector<16x2304xf32>
    %9 = vector.shape_cast %6 : vector<16x2304xf32> to vector<1x16x2304xf32>
    tpu.vector_store %arg5[%c0_6, %c0_7, %c0_8], %9 {strides = array<i32>} : memref<1x16x2304xf32, #tpu.memory_space<vmem>>, vector<1x16x2304xf32>,
    return
  }
  func.func @transform_0(%arg0: i32, %arg1: i32) -> (i32, i32) {
    %c0_i32 = arith.constant 0 : i32
    %c0_i32_0 = arith.constant 0 : i32
    %c0_i32_1 = arith.constant 0 : i32
    return %c0_i32, %c0_i32_0 : i32, i32
  }
  func.func @transform_1(%arg0: i32, %arg1: i32) -> (i32, i32, i32) {
    %c0_i32 = arith.constant 0 : i32
    %c0_i32_0 = arith.constant 0 : i32
    return %arg0, %c0_i32, %arg1 : i32, i32, i32
  }
  func.func @transform_2(%arg0: i32, %arg1: i32) -> (i32, i32) {
    %c0_i32 = arith.constant 0 : i32
    %c0_i32_0 = arith.constant 0 : i32
    %c0_i32_1 = arith.constant 0 : i32
    return %c0_i32, %c0_i32_0 : i32, i32
  }
  func.func @transform_3(%arg0: i32, %arg1: i32) -> (i32, i32, i32) {
    %c0_i32 = arith.constant 0 : i32
    %c0_i32_0 = arith.constant 0 : i32
    return %arg0, %c0_i32, %arg1 : i32, i32, i32
  }
}

</mosaic_0001>

<llo_original>
// kernel: pallas_convT.1
$region0: #{pallas_convT.1}
  #allocation0 [shape = 'u32[]', space=smem, size = 0x4, offset = 0x4, fixed_abs, tag = 'smem constant byte address 0x4 - core index']
  #allocation1 [shape = 'u32[72,128]{1,0:T(1,128)}', space=vmem, size = 0x9000, scoped, tag = 'internal scratch']
  %s0 = inlined_call_operand.vmem [shape: bf16[16,48], index: 0, kind: input, shape index: {}]
  %s1 = inlined_call_operand.hbm [shape: bf16[2,48,2304], index: 1, kind: input, shape index: {}]
  %s2 = inlined_call_operand.vmem [shape: f32[16,1], index: 2, kind: input, shape index: {}]
  %s3 = inlined_call_operand.hbm [shape: f32[2,16,2304], index: 3, kind: output, shape index: {}]
  %s4 = sld [smem:[#allocation0]]
  $region49: #{pallas_convT.1} parent=0
    _
  %s6 = ssub.s32 1, %s4
  %s7 = scalar_select 0, %s6, %s4
  $region1: #{pallas_convT.1} parent=0
    #allocation2 [shape = 'u8[442368]{0}', space=vmem, size = 0x6c000, scoped, tag = 'input window, operand 1']
    #allocation3 [shape = 's32[2]{0}', space=sflag, size = 0x8, scoped, tag = 'scoped memory for pallas_convT.1']
    #allocation4 [shape = 's32[2]{0}', space=sflag, size = 0x8, scoped, tag = 'scoped memory for pallas_convT.1']
    #allocation5 [shape = 'u8[294912]{0}', space=vmem, size = 0x48000, scoped, tag = 'output window, operand 0']
    %8 = vsyncpa [#allocation3], 0
    %s9 = scalar_lea.sflag [#allocation3], 1
    %10 = vsyncpa %s9, 0
    %11 = vsyncpa [#allocation4], 0
    %s12 = scalar_lea.sflag [#allocation4], 1
    %13 = vsyncpa %s12, 0
    loop: start=0, step=1, limit=4
    $region2: #{pallas_convT.1} parent=1 // loop_pre_header
      _
    $region3: #{pallas_convT.1} parent=1 // loop_header
      %s15 = sphi 0, %s19
      %p16 = scmp.ge.s32.totalorder %s15, 4
      %s22 = sphi 0, %s34
      %s23 = sphi 0, %s30
      %s24 = sphi 0, %s22
      %s25 = sphi 0, %s23
      %s26 = sphi 0, %s24
      %s27 = sphi 0, %s25
      %s35 = sphi 0, %s35
      %s37 = sphi 0, %s35
      %s38 = sphi 0, %s37
      %s52 = sphi 0, %s38
      %s60 = sphi 0, %s62
      %s63 = sphi 0, %s60
      %s64 = sphi 0, %s63
      %s80 = sphi 0, %s64
      %s84 = sphi 0, %s84
      %s86 = sphi 0, %s84
      %s87 = sphi 0, %s86
      %s101 = sphi 0, %s87
      %s109 = sphi 0, %s111
      %s112 = sphi 0, %s109
      %s113 = sphi 0, %s112
      %s129 = sphi 0, %s113
    $region4: #{pallas_convT.1} parent=1 // loop_header_branch
      %18 = sbr.rel (%p16) target = $region8
    $region5: #{pallas_convT.1} parent=1 // loop_body
      %s20 = ssub.s32 %s15, 1
      %s21 = ssub.s32 %s15, 2
      %s28 = sadd.s32 1, %s23
      %p29 = scmp.ge.s32.totalorder %s28, 1
      %s30 = scalar_select %p29, 0, %s28
      %s31 = sadd.s32 1, %s22
      %s32 = scalar_select %p29, %s31, %s22
      %p33 = scmp.ge.s32.totalorder %s32, 2
      %s34 = scalar_select %p33, 0, %s32
      %s36 = sadd.s32 %s35, 1
      %p39 = scmp.eq.s32.totalorder %s15, 1
      %p40 = scmp.ne.s32.totalorder %s35, %s37
      %p41 = scmp.eq.s32.totalorder %s15, 0
      %p42 = por %p40, %p41
      %p43 = scmp.ne.s32.totalorder %s35, %s37
      %p44 = scmp.eq.s32.totalorder %s20, 1
      %p45 = por %p43, %p44
      %p46 = scmp.ne.s32.totalorder %s37, %s38
      %p47 = scmp.eq.s32.totalorder %s20, 0
      %p48 = por %p46, %p47
      %p49 = scmp.ne.s32.totalorder %s37, %s38
      %p50 = scmp.eq.s32.totalorder %s21, 1
      %p51 = por %p49, %p50
      %p53 = scmp.ne.s32.totalorder %s38, %s52
      %p54 = scmp.eq.s32.totalorder %s21, 0
      %p55 = por %p53, %p54
      %s56 = ssub.s32 %s22, %s34
      %s57 = ssub.s32 %s23, %s30
      %s58 = sor.u32 %s56, %s57
      %p59 = scmp.eq.s32.totalorder %s58, 0
      %s61 = sadd.s32 %s60, 1
      %s62 = scalar_select %p59, %s60, %s61
      %p65 = pneg %p59
      %p66 = scmp.eq.s32.totalorder %s15, 1
      %p67 = por %p65, %p66
      %p68 = scmp.ne.s32.totalorder %s60, %s63
      %p69 = scmp.eq.s32.totalorder %s15, 0
      %p70 = por %p68, %p69
      %p71 = scmp.ne.s32.totalorder %s60, %s63
      %p72 = scmp.eq.s32.totalorder %s20, 1
      %p73 = por %p71, %p72
      %p74 = scmp.ne.s32.totalorder %s63, %s64
      %p75 = scmp.eq.s32.totalorder %s20, 0
      %p76 = por %p74, %p75
      %p77 = scmp.ne.s32.totalorder %s63, %s64
      %p78 = scmp.eq.s32.totalorder %s21, 1
      %p79 = por %p77, %p78
      %p81 = scmp.ne.s32.totalorder %s64, %s80
      %p82 = scmp.eq.s32.totalorder %s21, 0
      %p83 = por %p81, %p82
      %s85 = sadd.s32 %s84, 1
      %p88 = scmp.eq.s32.totalorder %s15, 1
      %p89 = scmp.ne.s32.totalorder %s84, %s86
      %p90 = scmp.eq.s32.totalorder %s15, 0
      %p91 = por %p89, %p90
      %p92 = scmp.ne.s32.totalorder %s84, %s86
      %p93 = scmp.eq.s32.totalorder %s20, 1
      %p94 = por %p92, %p93
      %p95 = scmp.ne.s32.totalorder %s86, %s87
      %p96 = scmp.eq.s32.totalorder %s20, 0
      %p97 = por %p95, %p96
      %p98 = scmp.ne.s32.totalorder %s86, %s87
      %p99 = scmp.eq.s32.totalorder %s21, 1
      %p100 = por %p98, %p99
      %p102 = scmp.ne.s32.totalorder %s87, %s101
      %p103 = scmp.eq.s32.totalorder %s21, 0
      %p104 = por %p102, %p103
      %s105 = ssub.s32 %s22, %s34
      %s106 = ssub.s32 %s23, %s30
      %s107 = sor.u32 %s105, %s106
      %p108 = scmp.eq.s32.totalorder %s107, 0
      %s110 = sadd.s32 %s109, 1
      %s111 = scalar_select %p108, %s109, %s110
      %p114 = pneg %p108
      %p115 = scmp.eq.s32.totalorder %s15, 1
      %p116 = por %p114, %p115
      %p117 = scmp.ne.s32.totalorder %s109, %s112
      %p118 = scmp.eq.s32.totalorder %s15, 0
      %p119 = por %p117, %p118
      %p120 = scmp.ne.s32.totalorder %s109, %s112
      %p121 = scmp.eq.s32.totalorder %s20, 1
      %p122 = por %p120, %p121
      %p123 = scmp.ne.s32.totalorder %s112, %s113
      %p124 = scmp.eq.s32.totalorder %s20, 0
      %p125 = por %p123, %p124
      %p126 = scmp.ne.s32.totalorder %s112, %s113
      %p127 = scmp.eq.s32.totalorder %s21, 1
      %p128 = por %p126, %p127
      %p130 = scmp.ne.s32.totalorder %s113, %s129
      %p131 = scmp.eq.s32.totalorder %s21, 0
      %p132 = por %p130, %p131
      %p133 = scmp.le.s32.totalorder 1, %s15
      %p134 = scmp.lt.s32.totalorder %s15, 3
      %p135 = pnand %p133, %p134
      %p136 = pneg %p135
      // Predicated region
      $region9: #{pallas_convT.1} parent=5 // pred_check
        _
      $region10: #{pallas_convT.1} parent=5 // pred_check_branch
        %138 = sbr.rel (%p135) target = $region12
      $region11: #{pallas_convT.1} parent=5 // pred_region
        %s139 = ssub.s32 %s15, 1
        // Predicated region
        $region13: #{pallas_convT.1} parent=11 // pred_check
          %p140 = pneg %p48
        $region14: #{pallas_convT.1} parent=11 // pred_check_branch
          %142 = sbr.rel (%p140) target = $region16
        $region15: #{pallas_convT.1} parent=11 // pred_region
          _
        $region16: #{pallas_convT.1} parent=11 // pred_fallthru
          _
        // Predicated region
        $region17: #{pallas_convT.1} parent=11 // pred_check
          %p143 = pneg %p97
        $region18: #{pallas_convT.1} parent=11 // pred_check_branch
          %145 = sbr.rel (%p143) target = $region20
        $region19: #{pallas_convT.1} parent=11 // pred_region
          _
        $region20: #{pallas_convT.1} parent=11 // pred_fallthru
          _
      $region12: #{pallas_convT.1} parent=5 // pred_fallthru
        _
      %p146 = scmp.lt.s32.totalorder %s15, 2
      // Predicated region
      $region21: #{pallas_convT.1} parent=5 // pred_check
        %p147 = pneg %p146
      $region22: #{pallas_convT.1} parent=5 // pred_check_branch
        %149 = sbr.rel (%p147) target = $region24
      $region23: #{pallas_convT.1} parent=5 // pred_region
        // Predicated region
        $region25: #{pallas_convT.1} parent=23 // pred_check
          %p150 = pneg %p70
        $region26: #{pallas_convT.1} parent=23 // pred_check_branch
          %152 = sbr.rel (%p150) target = $region28
        $region27: #{pallas_convT.1} parent=23 // pred_region
          %s153 = sand.u32 %s60, 1
          %s154 = scalar_lea.sflag [#allocation3], %s153
          %s155 = sand.u32 %s60, 1
          %s156 = smul.addr %s155, 432
          %s157 = scalar_lea.vmem [#allocation2], %s156
          %s158 = smul.u32 18, %s23
          %160 = vsyncadd %s154, 0
          %s161 = smul.addr %s22, 108
          %s162 = sadd.s32 %s158, %s161
          %s163 = smul.addr %s162, 4
          %s164 = scalar_lea.hbm %s1, %s163
          %s165 = sshll.u32 %s164, 4
          %s166 = int_to_ptr.hbm [resolvable:$true] %s165
          %s167 = sshll.u32 %s157, 4
          %s168 = int_to_ptr.vmem [resolvable:$true] %s167
          %173 = dma.hbm_to_vmem [thread:$0]  %s166, 6912, %s168, %s154, 1152, 1152, 72
        $region28: #{pallas_convT.1} parent=23 // pred_fallthru
          _
      $region24: #{pallas_convT.1} parent=5 // pred_fallthru
        _
      %p174 = scmp.le.s32.totalorder 1, %s15
      %p175 = scmp.lt.s32.totalorder %s15, 3
      %p176 = pnand %p174, %p175
      %p177 = pneg %p176
      // Predicated region
      $region29: #{pallas_convT.1} parent=5 // pred_check
        _
      $region30: #{pallas_convT.1} parent=5 // pred_check_branch
        %179 = sbr.rel (%p176) target = $region32
      $region31: #{pallas_convT.1} parent=5 // pred_region
        %s180 = ssub.s32 %s15, 1
        %s181 = sand.u32 %s63, 1
        %s182 = scalar_lea.sflag [#allocation3], %s181
        %s183 = sand.u32 %s63, 1
        %s184 = smul.addr %s183, 432
        %s185 = scalar_lea.vmem [#allocation2], %s184
        // Predicated region
        $region33: #{pallas_convT.1} parent=31 // pred_check
          %p186 = pneg %p76
        $region34: #{pallas_convT.1} parent=31 // pred_check_branch
          %188 = sbr.rel (%p186) target = $region36
        $region35: #{pallas_convT.1} parent=31 // pred_region
          %190 = dma.done %s182, 6912
        $region36: #{pallas_convT.1} parent=31 // pred_fallthru
          _
        %p191 = pneg %p48
        %p192 = pneg %p45
        %s193 = sand.u32 %s63, 1
        %s194 = scalar_lea.sflag [#allocation3], %s193
        %s195 = sand.u32 %s63, 1
        %s196 = smul.addr %s195, 432
        %s197 = scalar_lea.vmem [#allocation2], %s196
        %p198 = pneg %p76
        %p199 = pneg %p73
        %p200 = pneg %p97
        %p201 = pneg %p94
        %p202 = pneg %p125
        %p203 = pneg %p122
        %s204 = sand.u32 %s112, 1
        %s205 = scalar_lea.sflag [#allocation4], %s204
        %s206 = sand.u32 %s112, 1
        %s207 = smul.addr %s206, 288
        %s208 = scalar_lea.vmem [#allocation5], %s207
        %s209 = smul.u32 18, %s25
        %s210 = smul.u32 18, %s25
        %v212 = vld [vmem:[%s0] sm:$0xf]
        %v213 = vld [vmem:[%s0 + $0x4] sm:$0xf]
        %v214 = vld [vmem:[%s185] sm:$0xff]
        %v215 = vld [vmem:[%s185 + $0x8] sm:$0xff]
        %v216 = vld [vmem:[%s185 + $0x10] sm:$0xff]
        %v217 = vld [vmem:[%s185 + $0x18] sm:$0xff]
        %v218 = vld [vmem:[%s185 + $0x20] sm:$0xff]
        %v219 = vld [vmem:[%s185 + $0x28] sm:$0xff]
        %v220 = vld [vmem:[%s185 + $0x30] sm:$0xff]
        %v221 = vld [vmem:[%s185 + $0x38] sm:$0xff]
        %v222 = vld [vmem:[%s185 + $0x40] sm:$0xff]
        %v223 = vld [vmem:[%s185 + $0x48] sm:$0xff]
        %v224 = vld [vmem:[%s185 + $0x50] sm:$0xff]
        %v225 = vld [vmem:[%s185 + $0x58] sm:$0xff]
        %v226 = vld [vmem:[%s185 + $0x60] sm:$0xff]
        %v227 = vld [vmem:[%s185 + $0x68] sm:$0xff]
        %v228 = vld [vmem:[%s185 + $0x70] sm:$0xff]
        %v229 = vld [vmem:[%s185 + $0x78] sm:$0xff]
        %v230 = vld [vmem:[%s185 + $0x80] sm:$0xff]
        %v231 = vld [vmem:[%s185 + $0x88] sm:$0xff]
        %v232 = vld [vmem:[%s185 + $0x90] sm:$0xff]
        %v233 = vld [vmem:[%s185 + $0x98] sm:$0xff]
        %v234 = vld [vmem:[%s185 + $0xa0] sm:$0xff]
        %v235 = vld [vmem:[%s185 + $0xa8] sm:$0xff]
        %v236 = vld [vmem:[%s185 + $0xb0] sm:$0xff]
        %v237 = vld [vmem:[%s185 + $0xb8] sm:$0xff]
        %v238 = vld [vmem:[%s185 + $0xc0] sm:$0xff]
        %v239 = vld [vmem:[%s185 + $0xc8] sm:$0xff]
        %v240 = vld [vmem:[%s185 + $0xd0] sm:$0xff]
        %v241 = vld [vmem:[%s185 + $0xd8] sm:$0xff]
        %v242 = vld [vmem:[%s185 + $0xe0] sm:$0xff]
        %v243 = vld [vmem:[%s185 + $0xe8] sm:$0xff]
        %v244 = vld [vmem:[%s185 + $0xf0] sm:$0xff]
        %v245 = vld [vmem:[%s185 + $0xf8] sm:$0xff]
        %v246 = vld [vmem:[%s185 + $0x100] sm:$0xff]
        %v247 = vld [vmem:[%s185 + $0x108] sm:$0xff]
        %v248 = vld [vmem:[%s185 + $0x110] sm:$0xff]
        %v249 = vld [vmem:[%s185 + $0x118] sm:$0xff]
        %v250 = vld [vmem:[%s185 + $0x120] sm:$0xff]
        %v251 = vld [vmem:[%s185 + $0x128] sm:$0xff]
        %v252 = vld [vmem:[%s185 + $0x130] sm:$0xff]
        %v253 = vld [vmem:[%s185 + $0x138] sm:$0xff]
        %v254 = vld [vmem:[%s185 + $0x140] sm:$0xff]
        %v255 = vld [vmem:[%s185 + $0x148] sm:$0xff]
        %v256 = vld [vmem:[%s185 + $0x150] sm:$0xff]
        %v257 = vld [vmem:[%s185 + $0x158] sm:$0xff]
        %v258 = vld [vmem:[%s185 + $0x160] sm:$0xff]
        %v259 = vld [vmem:[%s185 + $0x168] sm:$0xff]
        %v260 = vld [vmem:[%s185 + $0x170] sm:$0xff]
        %v261 = vld [vmem:[%s185 + $0x178] sm:$0xff]
        %v262 = vld [vmem:[%s185 + $0x180] sm:$0xff]
        %v263 = vld [vmem:[%s185 + $0x188] sm:$0xff]
        %v264 = vld [vmem:[%s185 + $0x190] sm:$0xff]
        %v265 = vld [vmem:[%s185 + $0x198] sm:$0xff]
        %v266 = vld [vmem:[%s185 + $0x1a0] sm:$0xff]
        %v267 = vld [vmem:[%s185 + $0x1a8] sm:$0xff]
        %v268 = vld [vmem:[%s2] sm:$0xff]
        %v269 = vld [vmem:[%s2 + $0x8] sm:$0xff]
        %271 = vset.pattern.permute.xlu0 0
        %272 = vperm.xlu0 %271, %v268
        %v273 = vpop.permute.xlu0 %272
        %276 = vset.pattern.permute.xlu0 0
        %277 = vperm.xlu0 %276, %v269
        %v278 = vpop.permute.xlu0 %277
        %v282 = vunpack.c.l.b16 %v212
        %v283 = vunpack.c.l.b16 %v213
        %v284 = vpack.c.b16 %v283, %v282
        %v339 = vunpack.c.l.b16 %v214
        %v340 = vunpack.c.h.b16 %v214
        %v341 = vunpack.c.l.b16 %v215
        %v342 = vunpack.c.h.b16 %v215
        %v343 = vunpack.c.l.b16 %v216
        %v344 = vunpack.c.h.b16 %v216
        %v345 = vunpack.c.l.b16 %v217
        %v346 = vunpack.c.h.b16 %v217
        %v347 = vunpack.c.l.b16 %v218
        %v348 = vunpack.c.h.b16 %v218
        %v349 = vunpack.c.l.b16 %v219
        %v350 = vunpack.c.h.b16 %v219
        %v351 = vunpack.c.l.b16 %v220
        %v352 = vunpack.c.h.b16 %v220
        %v353 = vunpack.c.l.b16 %v221
        %v354 = vunpack.c.h.b16 %v221
        %v355 = vunpack.c.l.b16 %v222
        %v356 = vunpack.c.h.b16 %v222
        %v357 = vunpack.c.l.b16 %v223
        %v358 = vunpack.c.h.b16 %v223
        %v359 = vunpack.c.l.b16 %v224
        %v360 = vunpack.c.h.b16 %v224
        %v361 = vunpack.c.l.b16 %v225
        %v362 = vunpack.c.h.b16 %v225
        %v363 = vunpack.c.l.b16 %v226
        %v364 = vunpack.c.h.b16 %v226
        %v365 = vunpack.c.l.b16 %v227
        %v366 = vunpack.c.h.b16 %v227
        %v367 = vunpack.c.l.b16 %v228
        %v368 = vunpack.c.h.b16 %v228
        %v369 = vunpack.c.l.b16 %v229
        %v370 = vunpack.c.h.b16 %v229
        %v371 = vunpack.c.l.b16 %v230
        %v372 = vunpack.c.h.b16 %v230
        %v373 = vunpack.c.l.b16 %v231
        %v374 = vunpack.c.h.b16 %v231
        %v375 = vunpack.c.l.b16 %v232
        %v376 = vunpack.c.h.b16 %v232
        %v377 = vunpack.c.l.b16 %v233
        %v378 = vunpack.c.h.b16 %v233
        %v379 = vunpack.c.l.b16 %v234
        %v380 = vunpack.c.h.b16 %v234
        %v381 = vunpack.c.l.b16 %v235
        %v382 = vunpack.c.h.b16 %v235
        %v383 = vunpack.c.l.b16 %v236
        %v384 = vunpack.c.h.b16 %v236
        %v385 = vunpack.c.l.b16 %v237
        %v386 = vunpack.c.h.b16 %v237
        %v387 = vunpack.c.l.b16 %v238
        %v388 = vunpack.c.h.b16 %v238
        %v389 = vunpack.c.l.b16 %v239
        %v390 = vunpack.c.h.b16 %v239
        %v391 = vunpack.c.l.b16 %v240
        %v392 = vunpack.c.h.b16 %v240
        %v393 = vunpack.c.l.b16 %v241
        %v394 = vunpack.c.h.b16 %v241
        %v395 = vunpack.c.l.b16 %v242
        %v396 = vunpack.c.h.b16 %v242
        %v397 = vunpack.c.l.b16 %v243
        %v398 = vunpack.c.h.b16 %v243
        %v399 = vunpack.c.l.b16 %v244
        %v400 = vunpack.c.h.b16 %v244
        %v401 = vunpack.c.l.b16 %v245
        %v402 = vunpack.c.h.b16 %v245
        %v403 = vunpack.c.l.b16 %v246
        %v404 = vunpack.c.h.b16 %v246
        %v405 = vunpack.c.l.b16 %v247
        %v406 = vunpack.c.h.b16 %v247
        %v407 = vunpack.c.l.b16 %v248
        %v408 = vunpack.c.h.b16 %v248
        %v409 = vunpack.c.l.b16 %v249
        %v410 = vunpack.c.h.b16 %v249
        %v411 = vunpack.c.l.b16 %v250
        %v412 = vunpack.c.h.b16 %v250
        %v413 = vunpack.c.l.b16 %v251
        %v414 = vunpack.c.h.b16 %v251
        %v415 = vunpack.c.l.b16 %v252
        %v416 = vunpack.c.h.b16 %v252
        %v417 = vunpack.c.l.b16 %v253
        %v418 = vunpack.c.h.b16 %v253
        %v419 = vunpack.c.l.b16 %v254
        %v420 = vunpack.c.h.b16 %v254
        %v421 = vunpack.c.l.b16 %v255
        %v422 = vunpack.c.h.b16 %v255
        %v423 = vunpack.c.l.b16 %v256
        %v424 = vunpack.c.h.b16 %v256
        %v425 = vunpack.c.l.b16 %v257
        %v426 = vunpack.c.h.b16 %v257
        %v427 = vunpack.c.l.b16 %v258
        %v428 = vunpack.c.h.b16 %v258
        %v429 = vunpack.c.l.b16 %v259
        %v430 = vunpack.c.h.b16 %v259
        %v431 = vunpack.c.l.b16 %v260
        %v432 = vunpack.c.h.b16 %v260
        %v433 = vunpack.c.l.b16 %v261
        %v434 = vunpack.c.h.b16 %v261
        %v435 = vunpack.c.l.b16 %v262
        %v436 = vunpack.c.h.b16 %v262
        %v437 = vunpack.c.l.b16 %v263
        %v438 = vunpack.c.h.b16 %v263
        %v439 = vunpack.c.l.b16 %v264
        %v440 = vunpack.c.h.b16 %v264
        %v441 = vunpack.c.l.b16 %v265
        %v442 = vunpack.c.h.b16 %v265
        %v443 = vunpack.c.l.b16 %v266
        %v444 = vunpack.c.h.b16 %v266
        %v445 = vunpack.c.l.b16 %v267
        %v446 = vunpack.c.h.b16 %v267
        %v447 = vpack.c.b16 %v357, %v339
        %v448 = vpack.c.b16 %v358, %v340
        %v449 = vpack.c.b16 %v359, %v341
        %v450 = vpack.c.b16 %v360, %v342
        %v451 = vpack.c.b16 %v361, %v343
        %v452 = vpack.c.b16 %v362, %v344
        %v453 = vpack.c.b16 %v363, %v345
        %v454 = vpack.c.b16 %v364, %v346
        %v455 = vpack.c.b16 %v365, %v347
        %v456 = vpack.c.b16 %v366, %v348
        %v457 = vpack.c.b16 %v367, %v349
        %v458 = vpack.c.b16 %v368, %v350
        %v459 = vpack.c.b16 %v369, %v351
        %v460 = vpack.c.b16 %v370, %v352
        %v461 = vpack.c.b16 %v371, %v353
        %v462 = vpack.c.b16 %v372, %v354
        %v463 = vpack.c.b16 %v373, %v355
        %v464 = vpack.c.b16 %v374, %v356
        %v465 = vpack.c.b16 %v393, %v375
        %v466 = vpack.c.b16 %v394, %v376
        %v467 = vpack.c.b16 %v395, %v377
        %v468 = vpack.c.b16 %v396, %v378
        %v469 = vpack.c.b16 %v397, %v379
        %v470 = vpack.c.b16 %v398, %v380
        %v471 = vpack.c.b16 %v399, %v381
        %v472 = vpack.c.b16 %v400, %v382
        %v473 = vpack.c.b16 %v401, %v383
        %v474 = vpack.c.b16 %v402, %v384
        %v475 = vpack.c.b16 %v403, %v385
        %v476 = vpack.c.b16 %v404, %v386
        %v477 = vpack.c.b16 %v405, %v387
        %v478 = vpack.c.b16 %v406, %v388
        %v479 = vpack.c.b16 %v407, %v389
        %v480 = vpack.c.b16 %v408, %v390
        %v481 = vpack.c.b16 %v409, %v391
        %v482 = vpack.c.b16 %v410, %v392
        %v483 = vpack.c.b16 %v429, %v411
        %v484 = vpack.c.b16 %v430, %v412
        %v485 = vpack.c.b16 %v431, %v413
        %v486 = vpack.c.b16 %v432, %v414
        %v487 = vpack.c.b16 %v433, %v415
        %v488 = vpack.c.b16 %v434, %v416
        %v489 = vpack.c.b16 %v435, %v417
        %v490 = vpack.c.b16 %v436, %v418
        %v491 = vpack.c.b16 %v437, %v419
        %v492 = vpack.c.b16 %v438, %v420
        %v493 = vpack.c.b16 %v439, %v421
        %v494 = vpack.c.b16 %v440, %v422
        %v495 = vpack.c.b16 %v441, %v423
        %v496 = vpack.c.b16 %v442, %v424
        %v497 = vpack.c.b16 %v443, %v425
        %v498 = vpack.c.b16 %v444, %v426
        %v499 = vpack.c.b16 %v445, %v427
        %v500 = vpack.c.b16 %v446, %v428
        %vm555 = vcmask 392192
        %v557 = vsel %vm555, %v284, 0
        %559 = vmatpush.bf16.msra.mxu0 0
        %560 = vmatpush.bf16.msra.mxu0 0
        %561 = vmatpush.bf16.msra.mxu0 0
        %562 = vmatpush.bf16.msra.mxu0 0
        %563 = vmatpush.bf16.msra.mxu0 0
        %564 = vmatpush.bf16.msra.mxu0 %v483
        %565 = vmatpush.bf16.msra.mxu0 %v465
        %566 = vmatpush.bf16.msra.mxu0 %v447
        %567 = vmatmul.bf16.gmra.mxu0 %v557
        %v568 = vpop.f32.mrf.mxu0
        %v569 = vadd.f32 %v273, %v568
        %v570 = vpop.f32.mrf.mxu0
        %v571 = vadd.f32 %v278, %v570
        %572 = vdwg.mxu0
        %573 = vmatpush.bf16.msra.mxu0 0
        %574 = vmatpush.bf16.msra.mxu0 0
        %575 = vmatpush.bf16.msra.mxu0 0
        %576 = vmatpush.bf16.msra.mxu0 0
        %577 = vmatpush.bf16.msra.mxu0 0
        %578 = vmatpush.bf16.msra.mxu0 %v484
        %579 = vmatpush.bf16.msra.mxu0 %v466
        %580 = vmatpush.bf16.msra.mxu0 %v448
        %581 = vmatmul.bf16.gmra.mxu0 %v557
        %v582 = vpop.f32.mrf.mxu0
        %v583 = vadd.f32 %v273, %v582
        %v584 = vpop.f32.mrf.mxu0
        %v585 = vadd.f32 %v278, %v584
        %586 = vdwg.mxu0
        %587 = vmatpush.bf16.msra.mxu0 0
        %588 = vmatpush.bf16.msra.mxu0 0
        %589 = vmatpush.bf16.msra.mxu0 0
        %590 = vmatpush.bf16.msra.mxu0 0
        %591 = vmatpush.bf16.msra.mxu0 0
        %592 = vmatpush.bf16.msra.mxu0 %v485
        %593 = vmatpush.bf16.msra.mxu0 %v467
        %594 = vmatpush.bf16.msra.mxu0 %v449
        %595 = vmatmul.bf16.gmra.mxu0 %v557
        %v596 = vpop.f32.mrf.mxu0
        %v597 = vadd.f32 %v273, %v596
        %v598 = vpop.f32.mrf.mxu0
        %v599 = vadd.f32 %v278, %v598
        %600 = vdwg.mxu0
        %601 = vmatpush.bf16.msra.mxu0 0
        %602 = vmatpush.bf16.msra.mxu0 0
        %603 = vmatpush.bf16.msra.mxu0 0
        %604 = vmatpush.bf16.msra.mxu0 0
        %605 = vmatpush.bf16.msra.mxu0 0
        %606 = vmatpush.bf16.msra.mxu0 %v486
        %607 = vmatpush.bf16.msra.mxu0 %v468
        %608 = vmatpush.bf16.msra.mxu0 %v450
        %609 = vmatmul.bf16.gmra.mxu0 %v557
        %v610 = vpop.f32.mrf.mxu0
        %v611 = vadd.f32 %v273, %v610
        %v612 = vpop.f32.mrf.mxu0
        %v613 = vadd.f32 %v278, %v612
        %614 = vdwg.mxu0
        %615 = vmatpush.bf16.msra.mxu0 0
        %616 = vmatpush.bf16.msra.mxu0 0
        %617 = vmatpush.bf16.msra.mxu0 0
        %618 = vmatpush.bf16.msra.mxu0 0
        %619 = vmatpush.bf16.msra.mxu0 0
        %620 = vmatpush.bf16.msra.mxu0 %v487
        %621 = vmatpush.bf16.msra.mxu0 %v469
        %622 = vmatpush.bf16.msra.mxu0 %v451
        %623 = vmatmul.bf16.gmra.mxu0 %v557
        %v624 = vpop.f32.mrf.mxu0
        %v625 = vadd.f32 %v273, %v624
        %v626 = vpop.f32.mrf.mxu0
        %v627 = vadd.f32 %v278, %v626
        %628 = vdwg.mxu0
        %629 = vmatpush.bf16.msra.mxu0 0
        %630 = vmatpush.bf16.msra.mxu0 0
        %631 = vmatpush.bf16.msra.mxu0 0
        %632 = vmatpush.bf16.msra.mxu0 0
        %633 = vmatpush.bf16.msra.mxu0 0
        %634 = vmatpush.bf16.msra.mxu0 %v488
        %635 = vmatpush.bf16.msra.mxu0 %v470
        %636 = vmatpush.bf16.msra.mxu0 %v452
        %637 = vmatmul.bf16.gmra.mxu0 %v557
        %v638 = vpop.f32.mrf.mxu0
        %v639 = vadd.f32 %v273, %v638
        %v640 = vpop.f32.mrf.mxu0
        %v641 = vadd.f32 %v278, %v640
        %642 = vdwg.mxu0
        %643 = vmatpush.bf16.msra.mxu0 0
        %644 = vmatpush.bf16.msra.mxu0 0
        %645 = vmatpush.bf16.msra.mxu0 0
        %646 = vmatpush.bf16.msra.mxu0 0
        %647 = vmatpush.bf16.msra.mxu0 0
        %648 = vmatpush.bf16.msra.mxu0 %v489
        %649 = vmatpush.bf16.msra.mxu0 %v471
        %650 = vmatpush.bf16.msra.mxu0 %v453
        %651 = vmatmul.bf16.gmra.mxu0 %v557
        %v652 = vpop.f32.mrf.mxu0
        %v653 = vadd.f32 %v273, %v652
        %v654 = vpop.f32.mrf.mxu0
        %v655 = vadd.f32 %v278, %v654
        %656 = vdwg.mxu0
        %657 = vmatpush.bf16.msra.mxu0 0
        %658 = vmatpush.bf16.msra.mxu0 0
        %659 = vmatpush.bf16.msra.mxu0 0
        %660 = vmatpush.bf16.msra.mxu0 0
        %661 = vmatpush.bf16.msra.mxu0 0
        %662 = vmatpush.bf16.msra.mxu0 %v490
        %663 = vmatpush.bf16.msra.mxu0 %v472
        %664 = vmatpush.bf16.msra.mxu0 %v454
        %665 = vmatmul.bf16.gmra.mxu0 %v557
        %v666 = vpop.f32.mrf.mxu0
        %v667 = vadd.f32 %v273, %v666
        %v668 = vpop.f32.mrf.mxu0
        %v669 = vadd.f32 %v278, %v668
        %670 = vdwg.mxu0
        %671 = vmatpush.bf16.msra.mxu0 0
        %672 = vmatpush.bf16.msra.mxu0 0
        %673 = vmatpush.bf16.msra.mxu0 0
        %674 = vmatpush.bf16.msra.mxu0 0
        %675 = vmatpush.bf16.msra.mxu0 0
        %676 = vmatpush.bf16.msra.mxu0 %v491
        %677 = vmatpush.bf16.msra.mxu0 %v473
        %678 = vmatpush.bf16.msra.mxu0 %v455
        %679 = vmatmul.bf16.gmra.mxu0 %v557
        %v680 = vpop.f32.mrf.mxu0
        %v681 = vadd.f32 %v273, %v680
        %v682 = vpop.f32.mrf.mxu0
        %v683 = vadd.f32 %v278, %v682
        %684 = vdwg.mxu0
        %685 = vmatpush.bf16.msra.mxu0 0
        %686 = vmatpush.bf16.msra.mxu0 0
        %687 = vmatpush.bf16.msra.mxu0 0
        %688 = vmatpush.bf16.msra.mxu0 0
        %689 = vmatpush.bf16.msra.mxu0 0
        %690 = vmatpush.bf16.msra.mxu0 %v492
        %691 = vmatpush.bf16.msra.mxu0 %v474
        %692 = vmatpush.bf16.msra.mxu0 %v456
        %693 = vmatmul.bf16.gmra.mxu0 %v557
        %v694 = vpop.f32.mrf.mxu0
        %v695 = vadd.f32 %v273, %v694
        %v696 = vpop.f32.mrf.mxu0
        %v697 = vadd.f32 %v278, %v696
        %698 = vdwg.mxu0
        %699 = vmatpush.bf16.msra.mxu0 0
        %700 = vmatpush.bf16.msra.mxu0 0
        %701 = vmatpush.bf16.msra.mxu0 0
        %702 = vmatpush.bf16.msra.mxu0 0
        %703 = vmatpush.bf16.msra.mxu0 0
        %704 = vmatpush.bf16.msra.mxu0 %v493
        %705 = vmatpush.bf16.msra.mxu0 %v475
        %706 = vmatpush.bf16.msra.mxu0 %v457
        %707 = vmatmul.bf16.gmra.mxu0 %v557
        %v708 = vpop.f32.mrf.mxu0
        %v709 = vadd.f32 %v273, %v708
        %v710 = vpop.f32.mrf.mxu0
        %v711 = vadd.f32 %v278, %v710
        %712 = vdwg.mxu0
        %713 = vmatpush.bf16.msra.mxu0 0
        %714 = vmatpush.bf16.msra.mxu0 0
        %715 = vmatpush.bf16.msra.mxu0 0
        %716 = vmatpush.bf16.msra.mxu0 0
        %717 = vmatpush.bf16.msra.mxu0 0
        %718 = vmatpush.bf16.msra.mxu0 %v494
        %719 = vmatpush.bf16.msra.mxu0 %v476
        %720 = vmatpush.bf16.msra.mxu0 %v458
        %721 = vmatmul.bf16.gmra.mxu0 %v557
        %v722 = vpop.f32.mrf.mxu0
        %v723 = vadd.f32 %v273, %v722
        %v724 = vpop.f32.mrf.mxu0
        %v725 = vadd.f32 %v278, %v724
        %726 = vdwg.mxu0
        %727 = vmatpush.bf16.msra.mxu0 0
        %728 = vmatpush.bf16.msra.mxu0 0
        %729 = vmatpush.bf16.msra.mxu0 0
        %730 = vmatpush.bf16.msra.mxu0 0
        %731 = vmatpush.bf16.msra.mxu0 0
        %732 = vmatpush.bf16.msra.mxu0 %v495
        %733 = vmatpush.bf16.msra.mxu0 %v477
        %734 = vmatpush.bf16.msra.mxu0 %v459
        %735 = vmatmul.bf16.gmra.mxu0 %v557
        %v736 = vpop.f32.mrf.mxu0
        %v737 = vadd.f32 %v273, %v736
        %v738 = vpop.f32.mrf.mxu0
        %v739 = vadd.f32 %v278, %v738
        %740 = vdwg.mxu0
        %741 = vmatpush.bf16.msra.mxu0 0
        %742 = vmatpush.bf16.msra.mxu0 0
        %743 = vmatpush.bf16.msra.mxu0 0
        %744 = vmatpush.bf16.msra.mxu0 0
        %745 = vmatpush.bf16.msra.mxu0 0
        %746 = vmatpush.bf16.msra.mxu0 %v496
        %747 = vmatpush.bf16.msra.mxu0 %v478
        %748 = vmatpush.bf16.msra.mxu0 %v460
        %749 = vmatmul.bf16.gmra.mxu0 %v557
        %v750 = vpop.f32.mrf.mxu0
        %v751 = vadd.f32 %v273, %v750
        %v752 = vpop.f32.mrf.mxu0
        %v753 = vadd.f32 %v278, %v752
        %754 = vdwg.mxu0
        %755 = vmatpush.bf16.msra.mxu0 0
        %756 = vmatpush.bf16.msra.mxu0 0
        %757 = vmatpush.bf16.msra.mxu0 0
        %758 = vmatpush.bf16.msra.mxu0 0
        %759 = vmatpush.bf16.msra.mxu0 0
        %760 = vmatpush.bf16.msra.mxu0 %v497
        %761 = vmatpush.bf16.msra.mxu0 %v479
        %762 = vmatpush.bf16.msra.mxu0 %v461
        %763 = vmatmul.bf16.gmra.mxu0 %v557
        %v764 = vpop.f32.mrf.mxu0
        %v765 = vadd.f32 %v273, %v764
        %v766 = vpop.f32.mrf.mxu0
        %v767 = vadd.f32 %v278, %v766
        %768 = vdwg.mxu0
        %769 = vmatpush.bf16.msra.mxu0 0
        %770 = vmatpush.bf16.msra.mxu0 0
        %771 = vmatpush.bf16.msra.mxu0 0
        %772 = vmatpush.bf16.msra.mxu0 0
        %773 = vmatpush.bf16.msra.mxu0 0
        %774 = vmatpush.bf16.msra.mxu0 %v498
        %775 = vmatpush.bf16.msra.mxu0 %v480
        %776 = vmatpush.bf16.msra.mxu0 %v462
        %777 = vmatmul.bf16.gmra.mxu0 %v557
        %v778 = vpop.f32.mrf.mxu0
        %v779 = vadd.f32 %v273, %v778
        %v780 = vpop.f32.mrf.mxu0
        %v781 = vadd.f32 %v278, %v780
        %782 = vdwg.mxu0
        %783 = vmatpush.bf16.msra.mxu0 0
        %784 = vmatpush.bf16.msra.mxu0 0
        %785 = vmatpush.bf16.msra.mxu0 0
        %786 = vmatpush.bf16.msra.mxu0 0
        %787 = vmatpush.bf16.msra.mxu0 0
        %788 = vmatpush.bf16.msra.mxu0 %v499
        %789 = vmatpush.bf16.msra.mxu0 %v481
        %790 = vmatpush.bf16.msra.mxu0 %v463
        %791 = vmatmul.bf16.gmra.mxu0 %v557
        %v792 = vpop.f32.mrf.mxu0
        %v793 = vadd.f32 %v273, %v792
        %v794 = vpop.f32.mrf.mxu0
        %v795 = vadd.f32 %v278, %v794
        %796 = vdwg.mxu0
        %797 = vmatpush.bf16.msra.mxu0 0
        %798 = vmatpush.bf16.msra.mxu0 0
        %799 = vmatpush.bf16.msra.mxu0 0
        %800 = vmatpush.bf16.msra.mxu0 0
        %801 = vmatpush.bf16.msra.mxu0 0
        %802 = vmatpush.bf16.msra.mxu0 %v500
        %803 = vmatpush.bf16.msra.mxu0 %v482
        %804 = vmatpush.bf16.msra.mxu0 %v464
        %805 = vmatmul.bf16.gmra.mxu0 %v557
        %v806 = vpop.f32.mrf.mxu0
        %v807 = vadd.f32 %v273, %v806
        %v808 = vpop.f32.mrf.mxu0
        %v809 = vadd.f32 %v278, %v808
        %810 = vdwg.mxu0
        %811 = vst [vmem:[%s208] sm:$0xff] %v569
        %812 = vst [vmem:[%s208 + $0x8] sm:$0xff] %v583
        %813 = vst [vmem:[%s208 + $0x10] sm:$0xff] %v597
        %814 = vst [vmem:[%s208 + $0x18] sm:$0xff] %v611
        %815 = vst [vmem:[%s208 + $0x20] sm:$0xff] %v625
        %816 = vst [vmem:[%s208 + $0x28] sm:$0xff] %v639
        %817 = vst [vmem:[%s208 + $0x30] sm:$0xff] %v653
        %818 = vst [vmem:[%s208 + $0x38] sm:$0xff] %v667
        %819 = vst [vmem:[%s208 + $0x40] sm:$0xff] %v681
        %820 = vst [vmem:[%s208 + $0x48] sm:$0xff] %v695
        %821 = vst [vmem:[%s208 + $0x50] sm:$0xff] %v709
        %822 = vst [vmem:[%s208 + $0x58] sm:$0xff] %v723
        %823 = vst [vmem:[%s208 + $0x60] sm:$0xff] %v737
        %824 = vst [vmem:[%s208 + $0x68] sm:$0xff] %v751
        %825 = vst [vmem:[%s208 + $0x70] sm:$0xff] %v765
        %826 = vst [vmem:[%s208 + $0x78] sm:$0xff] %v779
        %827 = vst [vmem:[%s208 + $0x80] sm:$0xff] %v793
        %828 = vst [vmem:[%s208 + $0x88] sm:$0xff] %v807
        %829 = vst [vmem:[%s208 + $0x90] sm:$0xff] %v571
        %830 = vst [vmem:[%s208 + $0x98] sm:$0xff] %v585
        %831 = vst [vmem:[%s208 + $0xa0] sm:$0xff] %v599
        %832 = vst [vmem:[%s208 + $0xa8] sm:$0xff] %v613
        %833 = vst [vmem:[%s208 + $0xb0] sm:$0xff] %v627
        %834 = vst [vmem:[%s208 + $0xb8] sm:$0xff] %v641
        %835 = vst [vmem:[%s208 + $0xc0] sm:$0xff] %v655
        %836 = vst [vmem:[%s208 + $0xc8] sm:$0xff] %v669
        %837 = vst [vmem:[%s208 + $0xd0] sm:$0xff] %v683
        %838 = vst [vmem:[%s208 + $0xd8] sm:$0xff] %v697
        %839 = vst [vmem:[%s208 + $0xe0] sm:$0xff] %v711
        %840 = vst [vmem:[%s208 + $0xe8] sm:$0xff] %v725
        %841 = vst [vmem:[%s208 + $0xf0] sm:$0xff] %v739
        %842 = vst [vmem:[%s208 + $0xf8] sm:$0xff] %v753
        %843 = vst [vmem:[%s208 + $0x100] sm:$0xff] %v767
        %844 = vst [vmem:[%s208 + $0x108] sm:$0xff] %v781
        %845 = vst [vmem:[%s208 + $0x110] sm:$0xff] %v795
        %846 = vst [vmem:[%s208 + $0x118] sm:$0xff] %v809
        %s847 = sand.u32 %s112, 1
        %s848 = scalar_lea.sflag [#allocation4], %s847
        %s849 = sand.u32 %s112, 1
        %s850 = smul.addr %s849, 288
        %s851 = scalar_lea.vmem [#allocation5], %s850
        // Predicated region
        $region37: #{pallas_convT.1} parent=31 // pred_check
          %p852 = pneg %p122
        $region38: #{pallas_convT.1} parent=31 // pred_check_branch
          %854 = sbr.rel (%p852) target = $region40
        $region39: #{pallas_convT.1} parent=31 // pred_region
          %s855 = smul.u32 18, %s25
          %857 = vsyncadd %s848, 0
          %s858 = smul.addr %s24, 36
          %s859 = sadd.s32 %s855, %s858
          %s860 = smul.addr %s859, 8
          %s861 = scalar_lea.hbm %s3, %s860
          %s862 = sshll.u32 %s851, 4
          %s863 = int_to_ptr.vmem [resolvable:$true] %s862
          %s864 = sshll.u32 %s861, 4
          %s865 = int_to_ptr.hbm [resolvable:$true] %s864
          %870 = dma.vmem_to_hbm [thread:$0]  %s863, 4608, %s865, %s848, 2304, 2304, 144
        $region40: #{pallas_convT.1} parent=31 // pred_fallthru
          _
      $region32: #{pallas_convT.1} parent=5 // pred_fallthru
        _
      %p871 = scmp.le.s32.totalorder 2, %s15
      // Predicated region
      $region41: #{pallas_convT.1} parent=5 // pred_check
        %p872 = pneg %p871
      $region42: #{pallas_convT.1} parent=5 // pred_check_branch
        %874 = sbr.rel (%p872) target = $region44
      $region43: #{pallas_convT.1} parent=5 // pred_region
        %s875 = ssub.s32 %s15, 2
        // Predicated region
        $region45: #{pallas_convT.1} parent=43 // pred_check
          %p876 = pneg %p128
        $region46: #{pallas_convT.1} parent=43 // pred_check_branch
          %878 = sbr.rel (%p876) target = $region48
        $region47: #{pallas_convT.1} parent=43 // pred_region
          %s879 = sand.u32 %s113, 1
          %s880 = scalar_lea.sflag [#allocation4], %s879
          %s881 = sand.u32 %s113, 1
          %s882 = smul.addr %s881, 288
          %s883 = scalar_lea.vmem [#allocation5], %s882
          %885 = dma.done %s880, 4608
        $region48: #{pallas_convT.1} parent=43 // pred_fallthru
          _
      $region44: #{pallas_convT.1} parent=5 // pred_fallthru
        _
    $region6: #{pallas_convT.1} parent=1 // loop_footer
      %s19 = sadd.s32 1, %s15
    $region7: #{pallas_convT.1} parent=1 // loop_footer_branch
      %14 = sbr.rel target = $region3
    $region8: #{pallas_convT.1} parent=1 // loop_exit
      _
    %886 = vsyncpa [#allocation3], 1
    %s887 = scalar_lea.sflag [#allocation3], 1
    %888 = vsyncpa %s887, 1
    %889 = vsyncpa [#allocation4], 1
    %s890 = scalar_lea.sflag [#allocation4], 1
    %891 = vsyncpa %s890, 1

</llo_original>
